<compile_context>
chip_gen: v7x
topology: tpu7x:2x2x1
jax: 0.10.0
libtpu: 0.0.40
codegen_flags: <defaults>
</compile_context>

<pallas_src>
import functools

import jax
import jax.numpy as jnp
import numpy as np
from jax import lax
from jax.experimental import pallas as pl
from jax.experimental.pallas import tpu as pltpu


def _round_up(x, m):
    return (x + m - 1) // m * m


def _hloss_kernel(lo_ref, lf_ref, yl_ref, cm_ref, out_ref, acc_ref, *,
                  lambda_penalty, batch_size, block_rows, has_pad):
    i = pl.program_id(0)

    @pl.when(i == 0)
    def _init():
        acc_ref[...] = jnp.zeros_like(acc_ref)

    # Note: argmax / max run on f32 copies. For bf16 producers an exact logit tie
    # could in principle resolve differently than an argmax on the raw bf16 values.
    lo = lo_ref[...].astype(jnp.float32)    # [TB, No]
    lf = lf_ref[...].astype(jnp.float32)    # [TB, Nf]
    yl = yl_ref[...]                        # [TB, 2] int32
    cm = cm_ref[...].astype(jnp.float32)    # [No, Nf]

    TB, No = lo.shape
    _, Nf = lf.shape

    yo = yl[:, 0:1]                         # [TB, 1] order labels
    yf = yl[:, 1:2]                         # [TB, 1] family labels

    io = lax.broadcasted_iota(jnp.int32, (TB, No), 1)
    iff = lax.broadcasted_iota(jnp.int32, (TB, Nf), 1)

    # ----- order head: per-row cross-entropy + argmax prediction -----
    mo = jnp.max(lo, axis=-1, keepdims=True)
    sum_eo = jnp.sum(jnp.exp(lo - mo), axis=-1, keepdims=True)
    onehot_yo = (io == yo).astype(jnp.float32)
    logit_yo = jnp.sum(lo * onehot_yo, axis=-1, keepdims=True)
    ce_o = mo + jnp.log(sum_eo) - logit_yo                               # [TB, 1]
    # first-max tie-break (matches torch.argmax)
    pred_o = jnp.min(jnp.where(lo == mo, io, No), axis=-1, keepdims=True)

    # ----- family head -----
    mf = jnp.max(lf, axis=-1, keepdims=True)
    sum_ef = jnp.sum(jnp.exp(lf - mf), axis=-1, keepdims=True)
    onehot_yf = (iff == yf).astype(jnp.float32)
    logit_yf = jnp.sum(lf * onehot_yf, axis=-1, keepdims=True)
    ce_f = mf + jnp.log(sum_ef) - logit_yf                               # [TB, 1]
    pred_f = jnp.min(jnp.where(lf == mf, iff, Nf), axis=-1, keepdims=True)

    # ----- hierarchical penalty: compat[pred_o, pred_f] via one-hot MXU gather -----
    both_bad = jnp.logical_and(pred_o != yo, pred_f != yf).astype(jnp.float32)
    onehot_po = (io == pred_o).astype(jnp.float32)                       # [TB, No]
    onehot_pf = (iff == pred_f).astype(jnp.float32)                      # [TB, Nf]
    gathered = jnp.dot(onehot_po, cm, preferred_element_type=jnp.float32)  # [TB, Nf]
    compat = jnp.sum(gathered * onehot_pf, axis=-1, keepdims=True)       # [TB, 1]
    penalty = both_bad * (1.0 - compat)

    # Fused per-row partial -> a single sublane reduce per tile, scalar accumulate.
    per_row = ce_o + ce_f + lambda_penalty * penalty                     # [TB, 1]
    if has_pad:
        # Rows beyond the true batch (padding rows) contribute zero.
        row = lax.broadcasted_iota(jnp.int32, (TB, 1), 0) + i * block_rows
        per_row = per_row * (row < batch_size).astype(jnp.float32)
    acc_ref[...] = acc_ref[...] + jnp.sum(per_row, axis=0, keepdims=True)

    @pl.when(i == pl.num_programs(0) - 1)
    def _finalize():
        out_ref[...] = acc_ref[...] * (1.0 / batch_size)


def hierarchical_loss(logits_order, logits_family, labels_order, labels_family,
                      compatibility_matrix, lambda_penalty=0.1, block_rows=512):
    B, No = logits_order.shape
    _, Nf = logits_family.shape

    # Batch tile: multiple of 8 sublanes, capped at block_rows (default 512 rows
    # keeps the working set tiny -> safe on v7x's 64 MiB VMEM and v5e's 16 MiB
    # scoped default while staying near the HBM roofline).
    tb = _round_up(min(int(block_rows), _round_up(B, 8)), 8)
    num_tiles = pl.cdiv(B, tb)
    b_pad = num_tiles * tb

    labels = jnp.stack(
        [labels_order.astype(jnp.int32), labels_family.astype(jnp.int32)], axis=1)

    has_pad = b_pad != B
    if has_pad:
        pad = b_pad - B
        logits_order = jnp.pad(logits_order, ((0, pad), (0, 0)))
        logits_family = jnp.pad(logits_family, ((0, pad), (0, 0)))
        labels = jnp.pad(labels, ((0, pad), (0, 0)))

    cm = compatibility_matrix
    if cm.dtype != jnp.float32:
        cm = cm.astype(jnp.float32)

    kernel = functools.partial(
        _hloss_kernel,
        lambda_penalty=float(lambda_penalty),
        batch_size=int(B),
        block_rows=int(tb),
        has_pad=bool(has_pad),
    )

    itemsize = jnp.dtype(logits_order.dtype).itemsize
    cost = pl.CostEstimate(
        flops=2 * B * No * Nf + 12 * B * (No + Nf),
        transcendentals=B * (No + Nf + 2),
        bytes_accessed=B * (No + Nf) * itemsize + B * 2 * 4 + No * Nf * 4 + 4,
    )

    out = pl.pallas_call(
        kernel,
        out_shape=jax.ShapeDtypeStruct((1, 1), jnp.float32),
        grid_spec=pltpu.PrefetchScalarGridSpec(
            num_scalar_prefetch=0,
            grid=(num_tiles,),
            in_specs=[
                pl.BlockSpec((tb, No), lambda i: (i, 0)),
                pl.BlockSpec((tb, Nf), lambda i: (i, 0)),
                pl.BlockSpec((tb, 2), lambda i: (i, 0)),
                # compat matrix: constant index_map -> fetched once, stays resident
                pl.BlockSpec((No, Nf), lambda i: (0, 0)),
            ],
            out_specs=pl.BlockSpec((1, 1), lambda i: (0, 0)),
            scratch_shapes=[pltpu.VMEM((1, 1), jnp.float32)],
        ),
        compiler_params=pltpu.CompilerParams(
            dimension_semantics=("arbitrary",)),  # accumulator carried across steps
        cost_estimate=cost,
    )(logits_order, logits_family, labels, cm)
    return out[0, 0]


def _reference(logits_order, logits_family, labels_order, labels_family,
               compatibility_matrix, lambda_penalty=0.1):
    def ce(logits, labels):
        logp = jax.nn.log_softmax(logits.astype(jnp.float32), axis=-1)
        return -jnp.mean(jnp.take_along_axis(logp, labels[:, None], axis=-1))
    loss = ce(logits_order, labels_order) + ce(logits_family, labels_family)
    pred_o = jnp.argmax(logits_order, axis=-1)
    pred_f = jnp.argmax(logits_family, axis=-1)
    both_bad = ((pred_o != labels_order) & (pred_f != labels_family)).astype(jnp.float32)
    scores = compatibility_matrix[pred_o, pred_f]
    return loss + lambda_penalty * jnp.mean(both_bad * (1.0 - scores))


if __name__ == "__main__":
    NUM_ORDERS, NUM_FAMILIES = 8, 16
    LAMBDA = 0.1

    key = jax.random.PRNGKey(0)
    k1, k2, k3, k4, k5 = jax.random.split(key, 5)

    # Case 1: multi-tile grid with batch padding (B=20, 8-row tiles -> 3 steps).
    B = 20
    logits_order = jax.random.normal(k1, (B, NUM_ORDERS), dtype=jnp.float32)
    logits_family = jax.random.normal(k2, (B, NUM_FAMILIES), dtype=jnp.float32)
    labels_order = jax.random.randint(k3, (B,), 0, NUM_ORDERS, dtype=jnp.int32)
    labels_family = jax.random.randint(k4, (B,), 0, NUM_FAMILIES, dtype=jnp.int32)
    compat = jax.random.uniform(k5, (NUM_ORDERS, NUM_FAMILIES), dtype=jnp.float32)

    loss = hierarchical_loss(logits_order, logits_family, labels_order,
                             labels_family, compat, LAMBDA, block_rows=8)
    loss = jax.block_until_ready(loss)
    ref = _reference(logits_order, logits_family, labels_order,
                     labels_family, compat, LAMBDA)
    np.testing.assert_allclose(np.asarray(loss), np.asarray(ref),
                               rtol=1e-5, atol=1e-5)

    # Case 2: single-tile, no-padding path with default tile size (B=8).
    B2 = 8
    loss2 = hierarchical_loss(logits_order[:B2], logits_family[:B2],
                              labels_order[:B2], labels_family[:B2],
                              compat, LAMBDA)
    loss2 = jax.block_until_ready(loss2)
    ref2 = _reference(logits_order[:B2], logits_family[:B2],
                      labels_order[:B2], labels_family[:B2], compat, LAMBDA)
    np.testing.assert_allclose(np.asarray(loss2), np.asarray(ref2),
                               rtol=1e-5, atol=1e-5)

    print("KERNEL_OK")
</pallas_src>

<mosaic_0001>
module attributes {stable_mosaic.version = 11 : i64} {
  func.func @_hloss_kernel(%arg0: i32, %arg1: memref<8x8xf32, #tpu.memory_space<vmem>>, %arg2: memref<8x16xf32, #tpu.memory_space<vmem>>, %arg3: memref<8x2xi32, #tpu.memory_space<vmem>>, %arg4: memref<8x16xf32, #tpu.memory_space<vmem>>, %arg5: memref<1x1xf32, #tpu.memory_space<vmem>>, %arg6: memref<1x1xf32, #tpu.memory_space<vmem>>) attributes {dimension_semantics = [#tpu.dimension_semantics<arbitrary>], iteration_bounds = array<i64: 3>, scalar_prefetch = 0 : i64, scratch_operands = 1 : i64, tpu.core_type = #tpu.core_type<tc>, window_params = [{transform_indices = @transform_0, window_bounds = array<i64: 8, 8>}, {transform_indices = @transform_1, window_bounds = array<i64: 8, 16>}, {transform_indices = @transform_2, window_bounds = array<i64: 8, 2>}, {pipeline_mode = #tpu.pipeline_mode<synchronous>, transform_indices = @transform_3, window_bounds = array<i64: 8, 16>}, {pipeline_mode = #tpu.pipeline_mode<synchronous>, transform_indices = @transform_4, window_bounds = array<i64: 1, 1>}]} {
    %c0_i32 = arith.constant 0 : i32
    %0 = arith.cmpi eq, %arg0, %c0_i32 : i32
    %1 = arith.extui %0 : i1 to i32
    %c0_i32_0 = arith.constant 0 : i32
    %2 = arith.cmpi ne, %1, %c0_i32_0 : i32
    scf.if %2 {
      %cst_26 = arith.constant 0.000000e+00 : f32
      %98 = vector.broadcast %cst_26 : f32 to vector<1x1xf32>
      %c0_27 = arith.constant 0 : index
      %c0_28 = arith.constant 0 : index
      %99 = vector.load %arg6[%c0_27, %c0_28] : memref<1x1xf32, #tpu.memory_space<vmem>>, vector<1x1xf32>
      tpu.vector_store %arg6[%c0_27, %c0_28], %98 {strides = array<i32>} : memref<1x1xf32, #tpu.memory_space<vmem>>, vector<1x1xf32>,
    } else {
    }
    %c0 = arith.constant 0 : index
    %c0_1 = arith.constant 0 : index
    %3 = vector.load %arg1[%c0, %c0_1] : memref<8x8xf32, #tpu.memory_space<vmem>>, vector<8x8xf32>
    %c0_2 = arith.constant 0 : index
    %c0_3 = arith.constant 0 : index
    %4 = vector.load %arg2[%c0_2, %c0_3] : memref<8x16xf32, #tpu.memory_space<vmem>>, vector<8x16xf32>
    %c0_4 = arith.constant 0 : index
    %c0_5 = arith.constant 0 : index
    %5 = vector.load %arg3[%c0_4, %c0_5] : memref<8x2xi32, #tpu.memory_space<vmem>>, vector<8x2xi32>
    %c0_6 = arith.constant 0 : index
    %c0_7 = arith.constant 0 : index
    %6 = vector.load %arg4[%c0_6, %c0_7] : memref<8x16xf32, #tpu.memory_space<vmem>>, vector<8x16xf32>
    %7 = vector.extract_strided_slice %5 {offsets = [0, 0], sizes = [8, 1], strides = [1, 1]} : vector<8x2xi32> to vector<8x1xi32>
    %8 = vector.extract_strided_slice %5 {offsets = [0, 1], sizes = [8, 1], strides = [1, 1]} : vector<8x2xi32> to vector<8x1xi32>
    %9 = tpu.iota {dimensions = array<i32: 1>} : vector<8x8xi32>
    %10 = tpu.iota {dimensions = array<i32: 1>} : vector<8x16xi32>
    %cst = arith.constant dense<0xFF800000> : vector<8xf32>
    %11 = vector.multi_reduction <maximumf>, %3, %cst [1] : vector<8x8xf32> to vector<8xf32>
    %12 = vector.shape_cast %11 : vector<8xf32> to vector<8x1xf32>
    %13 = vector.broadcast %12 : vector<8x1xf32> to vector<8x8xf32>
    %14 = arith.subf %3, %13 : vector<8x8xf32>
    %15 = math.exp %14 : vector<8x8xf32>
    %cst_8 = arith.constant dense<0.000000e+00> : vector<8xf32>
    %16 = vector.multi_reduction <add>, %15, %cst_8 [1] : vector<8x8xf32> to vector<8xf32>
    %17 = vector.shape_cast %16 : vector<8xf32> to vector<8x1xf32>
    %18 = vector.broadcast %7 : vector<8x1xi32> to vector<8x8xi32>
    %19 = arith.cmpi eq, %9, %18 : vector<8x8xi32>
    %20 = arith.extui %19 : vector<8x8xi1> to vector<8x8xi32>
    %21 = arith.sitofp %20 : vector<8x8xi32> to vector<8x8xf32>
    %22 = arith.mulf %3, %21 : vector<8x8xf32>
    %cst_9 = arith.constant dense<0.000000e+00> : vector<8xf32>
    %23 = vector.multi_reduction <add>, %22, %cst_9 [1] : vector<8x8xf32> to vector<8xf32>
    %24 = vector.shape_cast %23 : vector<8xf32> to vector<8x1xf32>
    %25 = math.log %17 : vector<8x1xf32>
    %26 = arith.addf %12, %25 : vector<8x1xf32>
    %27 = arith.subf %26, %24 : vector<8x1xf32>
    %28 = vector.broadcast %12 : vector<8x1xf32> to vector<8x8xf32>
    %29 = arith.cmpf oeq, %3, %28 : vector<8x8xf32>
    %c8_i32 = arith.constant 8 : i32
    %30 = vector.broadcast %c8_i32 : i32 to vector<8x8xi32>
    %31 = arith.select %29, %9, %30 : vector<8x8xi1>, vector<8x8xi32>
    %cst_10 = arith.constant dense<2147483647> : vector<8xi32>
    %32 = vector.multi_reduction <minsi>, %31, %cst_10 [1] : vector<8x8xi32> to vector<8xi32>
    %33 = vector.shape_cast %32 : vector<8xi32> to vector<8x1xi32>
    %cst_11 = arith.constant dense<0xFF800000> : vector<8xf32>
    %34 = vector.multi_reduction <maximumf>, %4, %cst_11 [1] : vector<8x16xf32> to vector<8xf32>
    %35 = vector.shape_cast %34 : vector<8xf32> to vector<8x1xf32>
    %36 = vector.broadcast %35 : vector<8x1xf32> to vector<8x16xf32>
    %37 = arith.subf %4, %36 : vector<8x16xf32>
    %38 = math.exp %37 : vector<8x16xf32>
    %cst_12 = arith.constant dense<0.000000e+00> : vector<8xf32>
    %39 = vector.multi_reduction <add>, %38, %cst_12 [1] : vector<8x16xf32> to vector<8xf32>
    %40 = vector.shape_cast %39 : vector<8xf32> to vector<8x1xf32>
    %41 = vector.broadcast %8 : vector<8x1xi32> to vector<8x16xi32>
    %42 = arith.cmpi eq, %10, %41 : vector<8x16xi32>
    %43 = arith.extui %42 : vector<8x16xi1> to vector<8x16xi32>
    %44 = arith.sitofp %43 : vector<8x16xi32> to vector<8x16xf32>
    %45 = arith.mulf %4, %44 : vector<8x16xf32>
    %cst_13 = arith.constant dense<0.000000e+00> : vector<8xf32>
    %46 = vector.multi_reduction <add>, %45, %cst_13 [1] : vector<8x16xf32> to vector<8xf32>
    %47 = vector.shape_cast %46 : vector<8xf32> to vector<8x1xf32>
    %48 = math.log %40 : vector<8x1xf32>
    %49 = arith.addf %35, %48 : vector<8x1xf32>
    %50 = arith.subf %49, %47 : vector<8x1xf32>
    %51 = vector.broadcast %35 : vector<8x1xf32> to vector<8x16xf32>
    %52 = arith.cmpf oeq, %4, %51 : vector<8x16xf32>
    %c16_i32 = arith.constant 16 : i32
    %53 = vector.broadcast %c16_i32 : i32 to vector<8x16xi32>
    %54 = arith.select %52, %10, %53 : vector<8x16xi1>, vector<8x16xi32>
    %cst_14 = arith.constant dense<2147483647> : vector<8xi32>
    %55 = vector.multi_reduction <minsi>, %54, %cst_14 [1] : vector<8x16xi32> to vector<8xi32>
    %56 = vector.shape_cast %55 : vector<8xi32> to vector<8x1xi32>
    %57 = arith.cmpi ne, %33, %7 : vector<8x1xi32>
    %58 = arith.cmpi ne, %56, %8 : vector<8x1xi32>
    %59 = arith.andi %57, %58 : vector<8x1xi1>
    %60 = arith.extui %59 : vector<8x1xi1> to vector<8x1xi32>
    %61 = arith.sitofp %60 : vector<8x1xi32> to vector<8x1xf32>
    %62 = vector.broadcast %33 : vector<8x1xi32> to vector<8x8xi32>
    %63 = arith.cmpi eq, %9, %62 : vector<8x8xi32>
    %64 = arith.extui %63 : vector<8x8xi1> to vector<8x8xi32>
    %65 = arith.sitofp %64 : vector<8x8xi32> to vector<8x8xf32>
    %66 = vector.broadcast %56 : vector<8x1xi32> to vector<8x16xi32>
    %67 = arith.cmpi eq, %10, %66 : vector<8x16xi32>
    %68 = arith.extui %67 : vector<8x16xi1> to vector<8x16xi32>
    %69 = arith.sitofp %68 : vector<8x16xi32> to vector<8x16xf32>
    %cst_15 = arith.constant dense<0.000000e+00> : vector<8x16xf32>
    %70 = tpu.matmul %65, %6, %cst_15 {dimension_numbers = #tpu.dot_dimension_numbers<[1], [0], [0], [1], [0, 0, 1, 1], [], []>} : vector<8x8xf32>, vector<8x16xf32>, vector<8x16xf32> -> vector<8x16xf32>
    %71 = arith.mulf %70, %69 : vector<8x16xf32>
    %cst_16 = arith.constant dense<0.000000e+00> : vector<8xf32>
    %72 = vector.multi_reduction <add>, %71, %cst_16 [1] : vector<8x16xf32> to vector<8xf32>
    %73 = vector.shape_cast %72 : vector<8xf32> to vector<8x1xf32>
    %cst_17 = arith.constant 1.000000e+00 : f32
    %74 = vector.broadcast %cst_17 : f32 to vector<8x1xf32>
    %75 = arith.subf %74, %73 : vector<8x1xf32>
    %76 = arith.mulf %61, %75 : vector<8x1xf32>
    %77 = arith.addf %27, %50 : vector<8x1xf32>
    %cst_18 = arith.constant 1.000000e-01 : f32
    %78 = vector.broadcast %cst_18 : f32 to vector<8x1xf32>
    %79 = arith.mulf %78, %76 : vector<8x1xf32>
    %80 = arith.addf %77, %79 : vector<8x1xf32>
    %81 = tpu.iota {dimensions = array<i32: 0>} : vector<8x1xi32>
    %c8_i32_19 = arith.constant 8 : i32
    %82 = arith.muli %arg0, %c8_i32_19 : i32
    %83 = vector.broadcast %82 : i32 to vector<8x1xi32>
    %84 = arith.addi %81, %83 : vector<8x1xi32>
    %c20_i32 = arith.constant 20 : i32
    %85 = vector.broadcast %c20_i32 : i32 to vector<8x1xi32>
    %86 = arith.cmpi slt, %84, %85 : vector<8x1xi32>
    %87 = arith.extui %86 : vector<8x1xi1> to vector<8x1xi32>
    %88 = arith.sitofp %87 : vector<8x1xi32> to vector<8x1xf32>
    %89 = arith.mulf %80, %88 : vector<8x1xf32>
    %c0_20 = arith.constant 0 : index
    %c0_21 = arith.constant 0 : index
    %90 = vector.load %arg6[%c0_20, %c0_21] : memref<1x1xf32, #tpu.memory_space<vmem>>, vector<1x1xf32>
    %cst_22 = arith.constant dense<0.000000e+00> : vector<1xf32>
    %91 = vector.multi_reduction <add>, %89, %cst_22 [0] : vector<8x1xf32> to vector<1xf32>
    %92 = vector.shape_cast %91 : vector<1xf32> to vector<1x1xf32>
    %93 = arith.addf %90, %92 : vector<1x1xf32>
    %c0_23 = arith.constant 0 : index
    %c0_24 = arith.constant 0 : index
    %94 = vector.load %arg6[%c0_23, %c0_24] : memref<1x1xf32, #tpu.memory_space<vmem>>, vector<1x1xf32>
    tpu.vector_store %arg6[%c0_23, %c0_24], %93 {strides = array<i32>} : memref<1x1xf32, #tpu.memory_space<vmem>>, vector<1x1xf32>,
    %c2_i32 = arith.constant 2 : i32
    %95 = arith.cmpi eq, %arg0, %c2_i32 : i32
    %96 = arith.extui %95 : i1 to i32
    %c0_i32_25 = arith.constant 0 : i32
    %97 = arith.cmpi ne, %96, %c0_i32_25 : i32
    scf.if %97 {
      %c0_26 = arith.constant 0 : index
      %c0_27 = arith.constant 0 : index
      %98 = vector.load %arg6[%c0_26, %c0_27] : memref<1x1xf32, #tpu.memory_space<vmem>>, vector<1x1xf32>
      %cst_28 = arith.constant 5.000000e-02 : f32
      %99 = vector.broadcast %cst_28 : f32 to vector<1x1xf32>
      %100 = arith.mulf %98, %99 : vector<1x1xf32>
      %c0_29 = arith.constant 0 : index
      %c0_30 = arith.constant 0 : index
      %101 = vector.load %arg5[%c0_29, %c0_30] : memref<1x1xf32, #tpu.memory_space<vmem>>, vector<1x1xf32>
      tpu.vector_store %arg5[%c0_29, %c0_30], %100 {strides = array<i32>} : memref<1x1xf32, #tpu.memory_space<vmem>>, vector<1x1xf32>,
    } else {
    }
    return
  }
  func.func @transform_0(%arg0: i32) -> (i32, i32) {
    %c0_i32 = arith.constant 0 : i32
    %c0_i32_0 = arith.constant 0 : i32
    return %arg0, %c0_i32 : i32, i32
  }
  func.func @transform_1(%arg0: i32) -> (i32, i32) {
    %c0_i32 = arith.constant 0 : i32
    %c0_i32_0 = arith.constant 0 : i32
    return %arg0, %c0_i32 : i32, i32
  }
  func.func @transform_2(%arg0: i32) -> (i32, i32) {
    %c0_i32 = arith.constant 0 : i32
    %c0_i32_0 = arith.constant 0 : i32
    return %arg0, %c0_i32 : i32, i32
  }
  func.func @transform_3(%arg0: i32) -> (i32, i32) {
    %c0_i32 = arith.constant 0 : i32
    %c0_i32_0 = arith.constant 0 : i32
    %c0_i32_1 = arith.constant 0 : i32
    return %c0_i32, %c0_i32_0 : i32, i32
  }
  func.func @transform_4(%arg0: i32) -> (i32, i32) {
    %c0_i32 = arith.constant 0 : i32
    %c0_i32_0 = arith.constant 0 : i32
    %c0_i32_1 = arith.constant 0 : i32
    return %c0_i32, %c0_i32_0 : i32, i32
  }
}

</mosaic_0001>

<llo_original>
// kernel: tpu_custom_call.1
$region0: #{tpu_custom_call.1}
  #allocation0 [shape = 'u32[]', space=smem, size = 0x4, offset = 0x4, fixed_abs, tag = 'smem constant byte address 0x4 - core index']
  #allocation1 [shape = 'u32[144,128]{1,0:T(1,128)}', space=vmem, size = 0x12000, scoped, tag = 'internal scratch']
  #allocation2 [shape = 'f32[1,1]{1,0:T(1,128)}', space=vmem, size = 0x200, scoped, tag = 'scratch operand']
  %s0 = inlined_call_operand.vmem [shape: f32[24,8], index: 0, kind: input, shape index: {}]
  %s1 = inlined_call_operand.vmem [shape: f32[24,16], index: 1, kind: input, shape index: {}]
  %s2 = inlined_call_operand.vmem [shape: s32[24,2], index: 2, kind: input, shape index: {}]
  %s3 = inlined_call_operand.vmem [shape: f32[8,16], index: 3, kind: input, shape index: {}]
  %s4 = inlined_call_operand.hbm [shape: f32[1,1], index: 4, kind: output, shape index: {}]
  %s5 = sld [smem:[#allocation0]]
  $region57: #{tpu_custom_call.1} parent=0
    _
  %s7 = ssub.s32 1, %s5
  %s8 = scalar_select 0, %s7, %s5
  $region1: #{tpu_custom_call.1} parent=0
    #allocation3 [shape = 'u8[512]{0}', space=vmem, size = 0x400, scoped, tag = 'output window, operand 0, single buffered']
    #allocation4 [shape = 's32[2]{0}', space=sflag, size = 0x8, scoped, tag = 'scoped memory for tpu_custom_call.1']
    %9 = vsyncpa [#allocation4], 0
    loop: start=0, step=1, limit=5
    $region2: #{tpu_custom_call.1} parent=1 // loop_pre_header
      _
    $region3: #{tpu_custom_call.1} parent=1 // loop_header
      %s11 = sphi 0, %s15
      %p12 = scmp.ge.s32.totalorder %s11, 5
      %s21 = sphi 0, %s23
      %s24 = sphi 0, %s21
      %s25 = sphi 0, %s24
      %s41 = sphi 0, %s25
      %s47 = sphi 0, %s49
      %s50 = sphi 0, %s47
      %s51 = sphi 0, %s50
      %s67 = sphi 0, %s51
      %s73 = sphi 0, %s75
      %s76 = sphi 0, %s73
      %s77 = sphi 0, %s76
      %s93 = sphi 0, %s77
      %s97 = sphi 0, %s97
      %s99 = sphi 0, %s97
      %s100 = sphi 0, %s99
      %s114 = sphi 0, %s100
      %s118 = sphi 0, %s118
      %s120 = sphi 0, %s118
      %s121 = sphi 0, %s120
      %s135 = sphi 0, %s121
    $region4: #{tpu_custom_call.1} parent=1 // loop_header_branch
      %14 = sbr.rel (%p12) target = $region8
    $region5: #{tpu_custom_call.1} parent=1 // loop_body
      %s16 = ssub.s32 %s11, 1
      %s17 = ssub.s32 %s11, 2
      %s18 = sadd.s32 %s11, 1
      %s19 = ssub.s32 %s11, %s18
      %p20 = scmp.eq.s32.totalorder %s19, 0
      %s22 = sadd.s32 %s21, 1
      %s23 = scalar_select %p20, %s21, %s22
      %p26 = pneg %p20
      %p27 = scmp.eq.s32.totalorder %s11, 2
      %p28 = por %p26, %p27
      %p29 = scmp.ne.s32.totalorder %s21, %s24
      %p30 = scmp.eq.s32.totalorder %s11, 0
      %p31 = por %p29, %p30
      %p32 = scmp.ne.s32.totalorder %s21, %s24
      %p33 = scmp.eq.s32.totalorder %s16, 2
      %p34 = por %p32, %p33
      %p35 = scmp.ne.s32.totalorder %s24, %s25
      %p36 = scmp.eq.s32.totalorder %s16, 0
      %p37 = por %p35, %p36
      %p38 = scmp.ne.s32.totalorder %s24, %s25
      %p39 = scmp.eq.s32.totalorder %s17, 2
      %p40 = por %p38, %p39
      %p42 = scmp.ne.s32.totalorder %s25, %s41
      %p43 = scmp.eq.s32.totalorder %s17, 0
      %p44 = por %p42, %p43
      %s45 = ssub.s32 %s11, %s18
      %p46 = scmp.eq.s32.totalorder %s45, 0
      %s48 = sadd.s32 %s47, 1
      %s49 = scalar_select %p46, %s47, %s48
      %p52 = pneg %p46
      %p53 = scmp.eq.s32.totalorder %s11, 2
      %p54 = por %p52, %p53
      %p55 = scmp.ne.s32.totalorder %s47, %s50
      %p56 = scmp.eq.s32.totalorder %s11, 0
      %p57 = por %p55, %p56
      %p58 = scmp.ne.s32.totalorder %s47, %s50
      %p59 = scmp.eq.s32.totalorder %s16, 2
      %p60 = por %p58, %p59
      %p61 = scmp.ne.s32.totalorder %s50, %s51
      %p62 = scmp.eq.s32.totalorder %s16, 0
      %p63 = por %p61, %p62
      %p64 = scmp.ne.s32.totalorder %s50, %s51
      %p65 = scmp.eq.s32.totalorder %s17, 2
      %p66 = por %p64, %p65
      %p68 = scmp.ne.s32.totalorder %s51, %s67
      %p69 = scmp.eq.s32.totalorder %s17, 0
      %p70 = por %p68, %p69
      %s71 = ssub.s32 %s11, %s18
      %p72 = scmp.eq.s32.totalorder %s71, 0
      %s74 = sadd.s32 %s73, 1
      %s75 = scalar_select %p72, %s73, %s74
      %p78 = pneg %p72
      %p79 = scmp.eq.s32.totalorder %s11, 2
      %p80 = por %p78, %p79
      %p81 = scmp.ne.s32.totalorder %s73, %s76
      %p82 = scmp.eq.s32.totalorder %s11, 0
      %p83 = por %p81, %p82
      %p84 = scmp.ne.s32.totalorder %s73, %s76
      %p85 = scmp.eq.s32.totalorder %s16, 2
      %p86 = por %p84, %p85
      %p87 = scmp.ne.s32.totalorder %s76, %s77
      %p88 = scmp.eq.s32.totalorder %s16, 0
      %p89 = por %p87, %p88
      %p90 = scmp.ne.s32.totalorder %s76, %s77
      %p91 = scmp.eq.s32.totalorder %s17, 2
      %p92 = por %p90, %p91
      %p94 = scmp.ne.s32.totalorder %s77, %s93
      %p95 = scmp.eq.s32.totalorder %s17, 0
      %p96 = por %p94, %p95
      %s98 = sadd.s32 %s97, 1
      %p101 = scmp.eq.s32.totalorder %s11, 2
      %p102 = scmp.ne.s32.totalorder %s97, %s99
      %p103 = scmp.eq.s32.totalorder %s11, 0
      %p104 = por %p102, %p103
      %p105 = scmp.ne.s32.totalorder %s97, %s99
      %p106 = scmp.eq.s32.totalorder %s16, 2
      %p107 = por %p105, %p106
      %p108 = scmp.ne.s32.totalorder %s99, %s100
      %p109 = scmp.eq.s32.totalorder %s16, 0
      %p110 = por %p108, %p109
      %p111 = scmp.ne.s32.totalorder %s99, %s100
      %p112 = scmp.eq.s32.totalorder %s17, 2
      %p113 = por %p111, %p112
      %p115 = scmp.ne.s32.totalorder %s100, %s114
      %p116 = scmp.eq.s32.totalorder %s17, 0
      %p117 = por %p115, %p116
      %s119 = sadd.s32 %s118, 1
      %p122 = scmp.eq.s32.totalorder %s11, 2
      %p123 = scmp.ne.s32.totalorder %s118, %s120
      %p124 = scmp.eq.s32.totalorder %s11, 0
      %p125 = por %p123, %p124
      %p126 = scmp.ne.s32.totalorder %s118, %s120
      %p127 = scmp.eq.s32.totalorder %s16, 2
      %p128 = por %p126, %p127
      %p129 = scmp.ne.s32.totalorder %s120, %s121
      %p130 = scmp.eq.s32.totalorder %s16, 0
      %p131 = por %p129, %p130
      %p132 = scmp.ne.s32.totalorder %s120, %s121
      %p133 = scmp.eq.s32.totalorder %s17, 2
      %p134 = por %p132, %p133
      %p136 = scmp.ne.s32.totalorder %s121, %s135
      %p137 = scmp.eq.s32.totalorder %s17, 0
      %p138 = por %p136, %p137
      %p139 = scmp.le.s32.totalorder 1, %s11
      %p140 = scmp.lt.s32.totalorder %s11, 4
      %p141 = pnand %p139, %p140
      %p142 = pneg %p141
      // Predicated region
      $region9: #{tpu_custom_call.1} parent=5 // pred_check
        _
      $region10: #{tpu_custom_call.1} parent=5 // pred_check_branch
        %144 = sbr.rel (%p141) target = $region12
      $region11: #{tpu_custom_call.1} parent=5 // pred_region
        %s145 = ssub.s32 %s11, 1
        // Predicated region
        $region13: #{tpu_custom_call.1} parent=11 // pred_check
          %p146 = pneg %p110
        $region14: #{tpu_custom_call.1} parent=11 // pred_check_branch
          %148 = sbr.rel (%p146) target = $region16
        $region15: #{tpu_custom_call.1} parent=11 // pred_region
          _
        $region16: #{tpu_custom_call.1} parent=11 // pred_fallthru
          _
      $region12: #{tpu_custom_call.1} parent=5 // pred_fallthru
        _
      %p149 = scmp.lt.s32.totalorder %s11, 3
      // Predicated region
      $region17: #{tpu_custom_call.1} parent=5 // pred_check
        %p150 = pneg %p149
      $region18: #{tpu_custom_call.1} parent=5 // pred_check_branch
        %152 = sbr.rel (%p150) target = $region20
      $region19: #{tpu_custom_call.1} parent=5 // pred_region
        // Predicated region
        $region21: #{tpu_custom_call.1} parent=19 // pred_check
          %p153 = pneg %p31
        $region22: #{tpu_custom_call.1} parent=19 // pred_check_branch
          %155 = sbr.rel (%p153) target = $region24
        $region23: #{tpu_custom_call.1} parent=19 // pred_region
          %p156 = scmp.lt.s32.totalorder %s11, 2
          %s157 = scalar_select %p156, %s11, 2
          %s158 = smul.addr %s157, 8
          %s159 = scalar_lea.vmem %s0, %s158
        $region24: #{tpu_custom_call.1} parent=19 // pred_fallthru
          _
        // Predicated region
        $region25: #{tpu_custom_call.1} parent=19 // pred_check
          %p160 = pneg %p57
        $region26: #{tpu_custom_call.1} parent=19 // pred_check_branch
          %162 = sbr.rel (%p160) target = $region28
        $region27: #{tpu_custom_call.1} parent=19 // pred_region
          %p163 = scmp.lt.s32.totalorder %s11, 2
          %s164 = scalar_select %p163, %s11, 2
          %s165 = smul.addr %s164, 8
          %s166 = scalar_lea.vmem %s1, %s165
        $region28: #{tpu_custom_call.1} parent=19 // pred_fallthru
          _
        // Predicated region
        $region29: #{tpu_custom_call.1} parent=19 // pred_check
          %p167 = pneg %p83
        $region30: #{tpu_custom_call.1} parent=19 // pred_check_branch
          %169 = sbr.rel (%p167) target = $region32
        $region31: #{tpu_custom_call.1} parent=19 // pred_region
          %p170 = scmp.lt.s32.totalorder %s11, 2
          %s171 = scalar_select %p170, %s11, 2
          %s172 = smul.addr %s171, 8
          %s173 = scalar_lea.vmem %s2, %s172
        $region32: #{tpu_custom_call.1} parent=19 // pred_fallthru
          _
      $region20: #{tpu_custom_call.1} parent=5 // pred_fallthru
        _
      %p174 = scmp.le.s32.totalorder 1, %s11
      %p175 = scmp.lt.s32.totalorder %s11, 4
      %p176 = pnand %p174, %p175
      %p177 = pneg %p176
      // Predicated region
      $region33: #{tpu_custom_call.1} parent=5 // pred_check
        _
      $region34: #{tpu_custom_call.1} parent=5 // pred_check_branch
        %179 = sbr.rel (%p176) target = $region36
      $region35: #{tpu_custom_call.1} parent=5 // pred_region
        %s180 = ssub.s32 %s11, 1
        %p181 = scmp.lt.s32.totalorder %s16, 2
        %s182 = scalar_select %p181, %s16, 2
        %s183 = smul.addr %s182, 8
        %s184 = scalar_lea.vmem %s0, %s183
        %p185 = pneg %p37
        %p186 = pneg %p34
        %p187 = scmp.lt.s32.totalorder %s16, 2
        %s188 = scalar_select %p187, %s16, 2
        %s189 = smul.addr %s188, 8
        %s190 = scalar_lea.vmem %s1, %s189
        %p191 = pneg %p63
        %p192 = pneg %p60
        %p193 = scmp.lt.s32.totalorder %s16, 2
        %s194 = scalar_select %p193, %s16, 2
        %s195 = smul.addr %s194, 8
        %s196 = scalar_lea.vmem %s2, %s195
        %p197 = pneg %p89
        %p198 = pneg %p86
        %p199 = pneg %p110
        %p200 = pneg %p107
        %p201 = pneg %p131
        %p202 = pneg %p128
        %p203 = scmp.lt.s32.totalorder %s16, 2
        %s204 = scalar_select %p203, %s16, 2
        %s205 = smul.addr %s204, 8
        %s206 = scalar_lea.vmem %s0, %s205
        %p207 = scmp.lt.s32.totalorder %s16, 2
        %s208 = scalar_select %p207, %s16, 2
        %s209 = smul.addr %s208, 8
        %s210 = scalar_lea.vmem %s1, %s209
        %p211 = scmp.lt.s32.totalorder %s16, 2
        %s212 = scalar_select %p211, %s16, 2
        %s213 = smul.addr %s212, 8
        %s214 = scalar_lea.vmem %s2, %s213
        %p215 = scmp.eq.s32.totalorder %s16, 0
        // Predicated region
        $region37: #{tpu_custom_call.1} parent=35 // pred_check
          %p216 = pneg %p215
        $region38: #{tpu_custom_call.1} parent=35 // pred_check_branch
          %218 = sbr.rel (%p216) target = $region40
        $region39: #{tpu_custom_call.1} parent=35 // pred_region
          %vm219 = vcmask 0
          %220 = vst.msk [vmem:[#allocation2] sm:$0x1] %vm219, 0.0
        $region40: #{tpu_custom_call.1} parent=35 // pred_fallthru
          _
        %v221 = vld [vmem:[%s206] sm:$0xff]
        %v222 = vld [vmem:[%s210] sm:$0xff]
        %v223 = vld [vmem:[%s214] sm:$0xff]
        %v224 = vld [vmem:[%s3] sm:$0xff]
        %v225 = vlaneseq
        %v226 = vand.u32 %v225, 127
        %vm227 = vcmask 64512
        %v228 = vsel %vm227, %v221, -inf
        %229 = vmax.xlane.f32.xlu0 %v228
        %v230 = vpop.xlane.xlu0 %229
        %v231 = vsub.f32 %v221, %v230
        %v232 = vmul.f32 %v231, 1.442695
        %v233 = vpow.pop %v232
        %v234 = vsel %vm227, %v233, 0.0
        %235 = vadd.xlane.f32.xlu0 %v234
        %v236 = vpop.xlane.xlu0 %235
        %237 = vset.pattern.permute.xlu0 0
        %238 = vperm.xlu0 %237, %v223
        %v239 = vpop.permute.xlu0 %238
        %vm240 = vcmp.eq.s32.totalorder %v226, %v239
        %v241 = vsel %vm240, 1, 0
        %v242 = vcvt.s32.f32 %v241
        %v243 = vmul.f32 %v221, %v242
        %v244 = vsel %vm227, %v243, 0.0
        %245 = vadd.xlane.f32.xlu0 %v244
        %v246 = vpop.xlane.xlu0 %245
        %v247 = vlog2.pop %v236
        %v248 = vmul.f32 %v247, 0.6931472
        %v249 = vadd.f32 %v230, %v248
        %v250 = vsub.f32 %v249, %v246
        %vm251 = vcmp.eq.f32.partialorder %v221, %v230
        %v252 = vsel %vm251, %v226, 8
        %v253 = vsel %vm227, %v252, 2147483647
        %v254 = vand.u32 %v253, 65535
        %v255 = vshra.s32 %v253, 16
        %v256 = vcvt.s32.f32 %v254
        %v257 = vcvt.s32.f32 %v255
        %258 = vmin.xlane.f32.xlu0 %v257
        %v259 = vpop.xlane.xlu0 %258
        %vm260 = vcmp.eq.f32.partialorder %v257, %v259
        %v261 = vsel %vm260, %v256, inf
        %262 = vmin.xlane.f32.xlu0 %v261
        %v263 = vpop.xlane.xlu0 %262
        %v264 = vcvt.f32.s32 %v263
        %v265 = vcvt.f32.s32 %v259
        %v266 = vshll.u32 %v265, 16
        %v267 = vadd.s32 %v266, %v264
        %vm268 = vcmask 130048
        %v269 = vsel %vm268, %v222, -inf
        %270 = vmax.xlane.f32.xlu0 %v269
        %v271 = vpop.xlane.xlu0 %270
        %v272 = vsub.f32 %v222, %v271
        %v273 = vmul.f32 %v272, 1.442695
        %v274 = vpow.pop %v273
        %v275 = vsel %vm268, %v274, 0.0
        %276 = vadd.xlane.f32.xlu0 %v275
        %v277 = vpop.xlane.xlu0 %276
        %278 = vset.pattern.permute.xlu0 1
        %279 = vperm.xlu0 %278, %v223
        %v280 = vpop.permute.xlu0 %279
        %vm281 = vcmp.eq.s32.totalorder %v226, %v280
        %v282 = vsel %vm281, 1, 0
        %v283 = vcvt.s32.f32 %v282
        %v284 = vmul.f32 %v222, %v283
        %v285 = vsel %vm268, %v284, 0.0
        %286 = vadd.xlane.f32.xlu0 %v285
        %v287 = vpop.xlane.xlu0 %286
        %v288 = vlog2.pop %v277
        %v289 = vmul.f32 %v288, 0.6931472
        %v290 = vadd.f32 %v271, %v289
        %v291 = vsub.f32 %v290, %v287
        %vm292 = vcmp.eq.f32.partialorder %v222, %v271
        %v293 = vsel %vm292, %v226, 16
        %v294 = vsel %vm268, %v293, 2147483647
        %v295 = vand.u32 %v294, 65535
        %v296 = vshra.s32 %v294, 16
        %v297 = vcvt.s32.f32 %v295
        %v298 = vcvt.s32.f32 %v296
        %299 = vmin.xlane.f32.xlu0 %v298
        %v300 = vpop.xlane.xlu0 %299
        %vm301 = vcmp.eq.f32.partialorder %v298, %v300
        %v302 = vsel %vm301, %v297, inf
        %303 = vmin.xlane.f32.xlu0 %v302
        %v304 = vpop.xlane.xlu0 %303
        %v305 = vcvt.f32.s32 %v304
        %v306 = vcvt.f32.s32 %v300
        %v307 = vshll.u32 %v306, 16
        %v308 = vadd.s32 %v307, %v305
        %vm309 = vcmp.ne.s32.totalorder %v267, %v223
        %vm310 = vcmp.ne.s32.totalorder %v308, %v223
        %v311 = vsel %vm310, 1, 0
        %312 = vrot.lane.b32.xlu0 %v311, 127
        %v313 = vpop.permute.xlu0 %312
        %vm314 = vcmp.ne.s32.totalorder %v313, 0
        %vm315 = vmand %vm309, %vm314
        %v316 = vsel %vm315, 1, 0
        %v317 = vcvt.s32.f32 %v316
        %vm318 = vcmp.eq.s32.totalorder %v226, %v267
        %v319 = vsel %vm318, 1, 0
        %v320 = vcvt.s32.f32 %v319
        %vm321 = vcmp.eq.s32.totalorder %v226, %v308
        %v322 = vsel %vm321, 1, 0
        %v323 = vcvt.s32.f32 %v322
        %v325 = vsel %vm227, %v320, 0
        %327 = vmatprep.subr.mxu0 0.0
        %328 = vmatpush1.msra.mxu0 %v224
        %329 = vmatprep.subr.mxu0 0.0
        %330 = vmatpush1.msra.mxu0 0.0
        %331 = vmatprep.subr.mxu0 0.0
        %332 = vmatpush1.msra.mxu0 0.0
        %333 = vmatprep.subr.mxu0 0.0
        %334 = vmatpush1.msra.mxu0 0.0
        %335 = vmatprep.subr.mxu0 0.0
        %336 = vmatpush1.msra.mxu0 0.0
        %337 = vmatprep.subr.mxu0 0.0
        %338 = vmatpush1.msra.mxu0 0.0
        %339 = vmatprep.subr.mxu0 0.0
        %340 = vmatpush1.msra.mxu0 0.0
        %341 = vmatprep.subr.mxu0 0.0
        %342 = vmatpush1.msra.mxu0 0.0
        %343 = vmatprep.subr.mxu0 0.0
        %344 = vmatpush1.msra.mxu0 0.0
        %345 = vmatprep.subr.mxu0 0.0
        %346 = vmatpush1.msra.mxu0 0.0
        %347 = vmatprep.subr.mxu0 0.0
        %348 = vmatpush1.msra.mxu0 0.0
        %349 = vmatprep.subr.mxu0 0.0
        %350 = vmatpush1.msra.mxu0 0.0
        %351 = vmatprep.subr.mxu0 0.0
        %352 = vmatpush1.msra.mxu0 0.0
        %353 = vmatprep.subr.mxu0 0.0
        %354 = vmatpush1.msra.mxu0 0.0
        %355 = vmatprep.subr.mxu0 0.0
        %356 = vmatpush1.msra.mxu0 0.0
        %357 = vmatprep.subr.mxu0 0.0
        %358 = vmatpush1.msra.mxu0 0.0
        %359 = vmatprep.subr.mxu0 0.0
        %360 = vmatpush1.msra.mxu0 0.0
        %361 = vmatprep.subr.mxu0 0.0
        %362 = vmatpush1.msra.mxu0 0.0
        %363 = vmatprep.subr.mxu0 0.0
        %364 = vmatpush1.msra.mxu0 0.0
        %365 = vmatprep.subr.mxu0 0.0
        %366 = vmatpush1.msra.mxu0 0.0
        %367 = vmatprep.subr.mxu0 0.0
        %368 = vmatpush1.msra.mxu0 0.0
        %369 = vmatprep.subr.mxu0 0.0
        %370 = vmatpush1.msra.mxu0 0.0
        %371 = vmatprep.subr.mxu0 0.0
        %372 = vmatpush1.msra.mxu0 0.0
        %373 = vmatprep.subr.mxu0 0.0
        %374 = vmatpush1.msra.mxu0 0.0
        %375 = vmatprep.subr.mxu0 0.0
        %376 = vmatpush1.msra.mxu0 0.0
        %377 = vmatprep.subr.mxu0 0.0
        %378 = vmatpush1.msra.mxu0 0.0
        %379 = vmatprep.subr.mxu0 0.0
        %380 = vmatpush1.msra.mxu0 0.0
        %381 = vmatprep.subr.mxu0 0.0
        %382 = vmatpush1.msra.mxu0 0.0
        %383 = vmatprep.subr.mxu0 0.0
        %384 = vmatpush1.msra.mxu0 0.0
        %385 = vmatprep.subr.mxu0 0.0
        %386 = vmatpush1.msra.mxu0 0.0
        %387 = vmatprep.subr.mxu0 0.0
        %388 = vmatpush1.msra.mxu0 0.0
        %389 = vmatprep.subr.mxu0 0.0
        %390 = vmatpush1.msra.mxu0 0.0
        %391 = vmatprep.mubr.f32.mxu0 0.0
        %392 = vmatmul.mubr.f32.gmra.mrb[0].mxu0 %v325
        %v393 = vpop.f32.mrb[0].mxu0
        %v394 = vadd.f32 0.0, %v393
        %v395 = vpop.f32.mrb[0].mxu0
        %396 = vdwg.mxu0
        %v397 = vmul.f32 %v394, %v323
        %v398 = vsel %vm268, %v397, 0.0
        %399 = vadd.xlane.f32.xlu0 %v398
        %v400 = vpop.xlane.xlu0 %399
        %v401 = vsub.f32 1.0, %v400
        %v402 = vmul.f32 %v317, %v401
        %v403 = vadd.f32 %v250, %v291
        %v404 = vmul.f32 %v402, 0.1
        %v405 = vadd.f32 %v403, %v404
        %v406 = vlaneseq
        %v407 = vshrl.u32 %v406, 7
        %s408 = smul.u32 %s16, 8
        %v409 = vstv %s408
        %v410 = vadd.s32 %v407, %v409
        %vm411 = vcmp.lt.s32.totalorder %v410, 20
        %v412 = vsel %vm411, 1, 0
        %v413 = vcvt.s32.f32 %v412
        %v414 = vmul.f32 %v405, %v413
        %v415 = vld [vmem:[#allocation2] sm:$0x1]
        %vm416 = vcmask 7168
        %v417 = vsel %vm416, %v414, 0.0
        %v418 = vrot.slane %v417, 4
        %v419 = vadd.f32 %v417, %v418
        %v420 = vrot.slane %v419, 2
        %v421 = vadd.f32 %v419, %v420
        %v422 = vrot.slane %v421, 1
        %v423 = vadd.f32 %v421, %v422
        %v424 = vadd.f32 %v415, %v423
        %vm425 = vcmask 0
        %426 = vst.msk [vmem:[#allocation2] sm:$0x1] %vm425, %v424
        %p427 = scmp.eq.s32.totalorder %s16, 2
        // Predicated region
        $region41: #{tpu_custom_call.1} parent=35 // pred_check
          %p428 = pneg %p427
        $region42: #{tpu_custom_call.1} parent=35 // pred_check_branch
          %430 = sbr.rel (%p428) target = $region44
        $region43: #{tpu_custom_call.1} parent=35 // pred_region
          %v431 = vld [vmem:[#allocation2] sm:$0x1]
          %v432 = vmul.f32 %v431, 0.05
          %433 = vst.msk [vmem:[#allocation3] sm:$0x1] %vm425, %v432
        $region44: #{tpu_custom_call.1} parent=35 // pred_fallthru
          _
        // Predicated region
        $region45: #{tpu_custom_call.1} parent=35 // pred_check
          %p434 = pneg %p128
        $region46: #{tpu_custom_call.1} parent=35 // pred_check_branch
          %436 = sbr.rel (%p434) target = $region48
        $region47: #{tpu_custom_call.1} parent=35 // pred_region
          %s438 = ssub.s32 16, 16
          %439 = vsyncadd [#allocation4], %s438
          %s441 = sshll.u32 [#allocation3], 4
          %s442 = int_to_ptr.vmem [resolvable:$true] %s441
          %444 = dma.vmem_to_hbm [thread:$0]  %s442, 16, %s4, [#allocation4]
        $region48: #{tpu_custom_call.1} parent=35 // pred_fallthru
          _
        // Predicated region
        $region49: #{tpu_custom_call.1} parent=35 // pred_check
          %p445 = pneg %p128
        $region50: #{tpu_custom_call.1} parent=35 // pred_check_branch
          %447 = sbr.rel (%p445) target = $region52
        $region51: #{tpu_custom_call.1} parent=35 // pred_region
          %448 = dma.done [#allocation4], 16
        $region52: #{tpu_custom_call.1} parent=35 // pred_fallthru
          _
      $region36: #{tpu_custom_call.1} parent=5 // pred_fallthru
        _
      %p449 = scmp.le.s32.totalorder 2, %s11
      // Predicated region
      $region53: #{tpu_custom_call.1} parent=5 // pred_check
        %p450 = pneg %p449
      $region54: #{tpu_custom_call.1} parent=5 // pred_check_branch
        %452 = sbr.rel (%p450) target = $region56
      $region55: #{tpu_custom_call.1} parent=5 // pred_region
        %s453 = ssub.s32 %s11, 2
      $region56: #{tpu_custom_call.1} parent=5 // pred_fallthru
        _
    $region6: #{tpu_custom_call.1} parent=1 // loop_footer
      %s15 = sadd.s32 1, %s11
    $region7: #{tpu_custom_call.1} parent=1 // loop_footer_branch
      %10 = sbr.rel target = $region3
    $region8: #{tpu_custom_call.1} parent=1 // loop_exit
      _
    %454 = vsyncpa [#allocation4], 1
    %s455 = scalar_lea.sflag [#allocation4], 1
    %456 = vsyncpa %s455, 1

</llo_original>
